<compile_context>
chip_gen: v5e
topology: v5e:2x2
jax: 0.10.0
libtpu: 0.0.40
codegen_flags: <defaults>
</compile_context>

<pallas_src>
import functools  # noqa: F401  (kept for users who want to lru_cache the builder)

import numpy as np
import jax
import jax.numpy as jnp
from jax.experimental import pallas as pl
from jax.experimental.pallas import tpu as pltpu

KERNEL_SIZE = 3


def gaussian_kernel_2d(kernel_size=KERNEL_SIZE, sigma=0.4):
    """Normalized 2D Gaussian, identical to the PyTorch module's gaussian_kernel()."""
    radius = kernel_size // 2
    k = np.zeros((kernel_size, kernel_size), dtype=np.float64)
    for y in range(-radius, radius + 1):
        for x in range(-radius, radius + 1):
            k[y + radius, x + radius] = (
                1.0 / (2.0 * np.pi * sigma ** 2)
                * np.exp(-1.0 / (2.0 * sigma ** 2) * (x ** 2 + y ** 2))
            )
    return (k / k.sum()).astype(np.float32)


def gaussian_kernel_1d(kernel_size=KERNEL_SIZE, sigma=0.4):
    """1D separable factor: the normalized 2D kernel equals outer(g, g)."""
    radius = kernel_size // 2
    t = np.arange(-radius, radius + 1, dtype=np.float64)
    g = np.exp(-t * t / (2.0 * sigma ** 2))
    return g / g.sum()


def _make_blur_kernel(HW, W, g1):
    """Pallas kernel body. g1 is the center tap (Python float, baked in)."""

    def kernel(x_ref, aux_ref, o_ref):
        # x_ref:   (TS, HW)  -- TS packed (n, c) planes, each flattened on lanes
        # aux_ref: (5, HW) f32 -- [g0*not_left, g0*not_right, g0*not_top,
        #                          g0*not_bottom, 1/weight_mask]
        # o_ref:   (TS, HW)
        x = x_ref[...].astype(jnp.float32)
        aux = aux_ref[...]
        g0nl = aux[0:1, :]
        g0nr = aux[1:2, :]
        g0nt = aux[2:3, :]
        g0nb = aux[3:4, :]
        inv = aux[4:5, :]

        # Horizontal 3-tap pass: neighbours are +-1 lane away inside each row;
        # zero padding is emulated by the pre-scaled multiplicative masks.
        left = pltpu.roll(x, shift=1, axis=1)          # value at (i, j-1)
        right = pltpu.roll(x, shift=HW - 1, axis=1)    # value at (i, j+1)
        tmp = g1 * x + left * g0nl + right * g0nr

        # Vertical 3-tap pass: neighbours are +-W lanes away; first / last image
        # row (where the rotation would wrap) is zeroed by the masks.
        up = pltpu.roll(tmp, shift=W, axis=1)          # value at (i-1, j)
        down = pltpu.roll(tmp, shift=HW - W, axis=1)   # value at (i+1, j)
        acc = g1 * tmp + up * g0nt + down * g0nb

        o_ref[...] = (acc * inv).astype(o_ref.dtype)

    return kernel


def _pick_row_tile(rows, HW, budget_bytes):
    """Largest row-tile (multiple of 8) whose double-buffered f32 in+out blocks
    fit the VMEM budget; if the whole problem fits, use one full-extent block."""
    per_row = 4 * HW * 4          # 2 input bufs + 2 output bufs, f32
    cap = max(8, (budget_bytes // per_row) // 8 * 8)
    return int(rows if rows <= cap else cap)


def _build_blur_call(rows_pad, HW, W, g1, ts, io_dtype):
    """Build the pallas_call once for a given padded-row count / tile size."""
    return pl.pallas_call(
        _make_blur_kernel(HW, W, g1),
        out_shape=jax.ShapeDtypeStruct((rows_pad, HW), io_dtype),
        grid_spec=pltpu.PrefetchScalarGridSpec(
            num_scalar_prefetch=0,
            grid=(rows_pad // ts,),
            in_specs=[
                pl.BlockSpec((ts, HW), lambda r: (r, 0)),   # x row-tile
                pl.BlockSpec((5, HW), lambda r: (0, 0)),    # aux, stays resident
            ],
            out_specs=pl.BlockSpec((ts, HW), lambda r: (r, 0)),
        ),
        compiler_params=pltpu.CompilerParams(
            dimension_semantics=("parallel",),
            vmem_limit_bytes=32 * 1024 * 1024,
        ),
    )


class GaussianBlur2D:
    """JAX/Pallas port of the PyTorch GaussianBlur2D module (forward pass)."""

    def __init__(self, kernel_size=3, sigma=0.4, channels=3, height=16, width=16,
                 io_dtype=jnp.float32, vmem_block_budget_bytes=24 * 1024 * 1024):
        assert kernel_size == KERNEL_SIZE, "kernel is specialized for the 3x3 case"
        self.kernel_size = kernel_size
        self.sigma = sigma
        self.channels = channels
        self.height = height
        self.width = width
        # io_dtype=jnp.bfloat16 halves HBM traffic on v5e/v6e but deviates from
        # the module's .float() numerics; default f32 matches the reference.
        self.io_dtype = io_dtype
        self._budget = vmem_block_budget_bytes
        self._cache = {}

        g = gaussian_kernel_1d(kernel_size, sigma)     # separable taps, g[0]==g[2]
        self.g0 = float(g[0])
        self.g1 = float(g[1])

        H, W = height, width
        HW = H * W
        idx = np.arange(HW, dtype=np.int64)
        col = idx % W
        row = idx // W
        nl = (col > 0).astype(np.float64)      # 1.0 where a left  neighbour exists
        nr = (col < W - 1).astype(np.float64)  # 1.0 where a right neighbour exists
        nt = (row > 0).astype(np.float64)      # 1.0 where an upper neighbour exists
        nb = (row < H - 1).astype(np.float64)  # 1.0 where a lower neighbour exists

        # weight_mask() in closed form: the zero-padded conv of ones with the
        # separable kernel factors as mask = v_factor * h_factor per pixel.
        h_factor = self.g1 + self.g0 * (nl + nr)
        v_factor = self.g1 + self.g0 * (nt + nb)
        inv_mask = 1.0 / (h_factor * v_factor)

        aux = np.stack(
            [self.g0 * nl, self.g0 * nr, self.g0 * nt, self.g0 * nb, inv_mask],
            axis=0,
        ).astype(np.float32)
        self.aux = jnp.asarray(aux)            # (5, H*W)

    def _blur_fn(self, batch):
        """Build (once per batch size) and cache the jitted launch path."""
        fn = self._cache.get(batch)
        if fn is not None:
            return fn

        C, H, W = self.channels, self.height, self.width
        HW = H * W
        rows = batch * C
        ts = _pick_row_tile(rows, HW, self._budget)
        rows_pad = -(-rows // ts) * ts
        call = _build_blur_call(rows_pad, HW, W, self.g1, ts, self.io_dtype)
        io_dtype = self.io_dtype

        def blur(x, aux):
            x2d = x.astype(io_dtype).reshape(rows, HW)   # contiguous view, no copy
            if rows_pad != rows:
                x2d = jnp.pad(x2d, ((0, rows_pad - rows), (0, 0)))
            out = call(x2d, aux)
            # matches output.float() in the torch module
            return out[:rows].astype(jnp.float32).reshape(batch, C, H, W)

        fn = jax.jit(blur)
        self._cache[batch] = fn
        return fn

    def __call__(self, x):
        N, C, H, W = x.shape
        assert (C, H, W) == (self.channels, self.height, self.width)
        return self._blur_fn(N)(x, self.aux)


def _reference(x, kernel_size=3, sigma=0.4):
    """Plain-JAX (non-Pallas) reference: explicit zero-padded 9-tap depthwise
    conv divided by the conv of ones, exactly like the PyTorch module."""
    k2 = gaussian_kernel_2d(kernel_size, sigma)
    N, C, H, W = x.shape

    def conv(t):
        tp = jnp.pad(t, ((0, 0), (0, 0), (1, 1), (1, 1)))
        acc = jnp.zeros(t.shape, jnp.float32)
        for ky in range(kernel_size):
            for kx in range(kernel_size):
                acc = acc + float(k2[ky, kx]) * tp[:, :, ky:ky + H, kx:kx + W]
        return acc

    mask = conv(jnp.ones((1, C, H, W), jnp.float32))
    return conv(x.astype(jnp.float32)) / mask


if __name__ == "__main__":
    N, C, H, W = 2, 4, 16, 16
    key = jax.random.PRNGKey(0)
    x = jax.random.normal(key, (N, C, H, W), dtype=jnp.float32)

    blur = GaussianBlur2D(kernel_size=3, sigma=0.4, channels=C, height=H, width=W)
    out = jax.block_until_ready(blur(x))

    ref = _reference(x)
    np.testing.assert_allclose(np.asarray(out), np.asarray(ref), rtol=1e-5, atol=1e-5)

    print("KERNEL_OK")
</pallas_src>

<mosaic_0001>
module attributes {stable_mosaic.version = 11 : i64} {
  func.func @kernel(%arg0: i32, %arg1: memref<8x256xf32, #tpu.memory_space<vmem>>, %arg2: memref<5x256xf32, #tpu.memory_space<vmem>>, %arg3: memref<8x256xf32, #tpu.memory_space<vmem>>) attributes {dimension_semantics = [#tpu.dimension_semantics<parallel>], iteration_bounds = array<i64: 1>, scalar_prefetch = 0 : i64, scratch_operands = 0 : i64, tpu.core_type = #tpu.core_type<tc>, window_params = [{transform_indices = @transform_0, window_bounds = array<i64: 8, 256>}, {pipeline_mode = #tpu.pipeline_mode<synchronous>, transform_indices = @transform_1, window_bounds = array<i64: 5, 256>}, {transform_indices = @transform_2, window_bounds = array<i64: 8, 256>}]} {
    %c0 = arith.constant 0 : index
    %c0_0 = arith.constant 0 : index
    %0 = vector.load %arg1[%c0, %c0_0] : memref<8x256xf32, #tpu.memory_space<vmem>>, vector<8x256xf32>
    %c0_1 = arith.constant 0 : index
    %c0_2 = arith.constant 0 : index
    %1 = vector.load %arg2[%c0_1, %c0_2] : memref<5x256xf32, #tpu.memory_space<vmem>>, vector<5x256xf32>
    %2 = vector.extract_strided_slice %1 {offsets = [0, 0], sizes = [1, 256], strides = [1, 1]} : vector<5x256xf32> to vector<1x256xf32>
    %3 = vector.extract_strided_slice %1 {offsets = [1, 0], sizes = [1, 256], strides = [1, 1]} : vector<5x256xf32> to vector<1x256xf32>
    %4 = vector.extract_strided_slice %1 {offsets = [2, 0], sizes = [1, 256], strides = [1, 1]} : vector<5x256xf32> to vector<1x256xf32>
    %5 = vector.extract_strided_slice %1 {offsets = [3, 0], sizes = [1, 256], strides = [1, 1]} : vector<5x256xf32> to vector<1x256xf32>
    %6 = vector.extract_strided_slice %1 {offsets = [4, 0], sizes = [1, 256], strides = [1, 1]} : vector<5x256xf32> to vector<1x256xf32>
    %c1_i32 = arith.constant 1 : i32
    %7 = tpu.dynamic_rotate %0 by %c1_i32 dim 1 : vector<8x256xf32>, i32 -> vector<8x256xf32>
    %c255_i32 = arith.constant 255 : i32
    %8 = tpu.dynamic_rotate %0 by %c255_i32 dim 1 : vector<8x256xf32>, i32 -> vector<8x256xf32>
    %cst = arith.constant 0.919224202 : f32
    %9 = vector.broadcast %cst : f32 to vector<8x256xf32>
    %10 = arith.mulf %9, %0 : vector<8x256xf32>
    %11 = vector.broadcast %2 : vector<1x256xf32> to vector<8x256xf32>
    %12 = arith.mulf %7, %11 : vector<8x256xf32>
    %13 = arith.addf %10, %12 : vector<8x256xf32>
    %14 = vector.broadcast %3 : vector<1x256xf32> to vector<8x256xf32>
    %15 = arith.mulf %8, %14 : vector<8x256xf32>
    %16 = arith.addf %13, %15 : vector<8x256xf32>
    %c16_i32 = arith.constant 16 : i32
    %17 = tpu.dynamic_rotate %16 by %c16_i32 dim 1 : vector<8x256xf32>, i32 -> vector<8x256xf32>
    %c240_i32 = arith.constant 240 : i32
    %18 = tpu.dynamic_rotate %16 by %c240_i32 dim 1 : vector<8x256xf32>, i32 -> vector<8x256xf32>
    %cst_3 = arith.constant 0.919224202 : f32
    %19 = vector.broadcast %cst_3 : f32 to vector<8x256xf32>
    %20 = arith.mulf %19, %16 : vector<8x256xf32>
    %21 = vector.broadcast %4 : vector<1x256xf32> to vector<8x256xf32>
    %22 = arith.mulf %17, %21 : vector<8x256xf32>
    %23 = arith.addf %20, %22 : vector<8x256xf32>
    %24 = vector.broadcast %5 : vector<1x256xf32> to vector<8x256xf32>
    %25 = arith.mulf %18, %24 : vector<8x256xf32>
    %26 = arith.addf %23, %25 : vector<8x256xf32>
    %27 = vector.broadcast %6 : vector<1x256xf32> to vector<8x256xf32>
    %28 = arith.mulf %26, %27 : vector<8x256xf32>
    %c0_4 = arith.constant 0 : index
    %c0_5 = arith.constant 0 : index
    %29 = vector.load %arg3[%c0_4, %c0_5] : memref<8x256xf32, #tpu.memory_space<vmem>>, vector<8x256xf32>
    tpu.vector_store %arg3[%c0_4, %c0_5], %28 {strides = array<i32>} : memref<8x256xf32, #tpu.memory_space<vmem>>, vector<8x256xf32>,
    return
  }
  func.func @transform_0(%arg0: i32) -> (i32, i32) {
    %c0_i32 = arith.constant 0 : i32
    %c0_i32_0 = arith.constant 0 : i32
    return %arg0, %c0_i32 : i32, i32
  }
  func.func @transform_1(%arg0: i32) -> (i32, i32) {
    %c0_i32 = arith.constant 0 : i32
    %c0_i32_0 = arith.constant 0 : i32
    %c0_i32_1 = arith.constant 0 : i32
    return %c0_i32, %c0_i32_0 : i32, i32
  }
  func.func @transform_2(%arg0: i32) -> (i32, i32) {
    %c0_i32 = arith.constant 0 : i32
    %c0_i32_0 = arith.constant 0 : i32
    return %arg0, %c0_i32 : i32, i32
  }
}

</mosaic_0001>

<llo_original>
// kernel: blur.1
$region0: #{blur.1}
  #allocation0 [shape = 'u32[]', space=smem, size = 0x4, offset = 0x4, fixed_abs, tag = 'smem constant byte address 0x4 - core index']
  #allocation1 [shape = 'u32[72,128]{1,0:T(1,128)}', space=vmem, size = 0x9000, scoped, tag = 'internal scratch']
  %s0 = inlined_call_operand.vmem [shape: f32[8,256], index: 0, kind: input, shape index: {}]
  %s1 = inlined_call_operand.vmem [shape: f32[5,256], index: 1, kind: input, shape index: {}]
  %s2 = inlined_call_operand.vmem [shape: f32[8,256], index: 2, kind: output, shape index: {}]
  %s3 = sld [smem:[#allocation0]]
  $region18: #{blur.1} parent=0
    _
  %s5 = ssub.s32 1, %s3
  %s6 = scalar_select 0, %s5, %s3
  // Predicated region
  $region2: #{blur.1} parent=0 // pred_check
    _
  $region3: #{blur.1} parent=0 // pred_check_branch
    %8 = sbr.rel (0) target = $region5
  $region4: #{blur.1} parent=0 // pred_region
    _
  $region5: #{blur.1} parent=0 // pred_fallthru
    _
  // Predicated region
  $region6: #{blur.1} parent=0 // pred_check
    _
  $region7: #{blur.1} parent=0 // pred_check_branch
    %10 = sbr.rel (0) target = $region9
  $region8: #{blur.1} parent=0 // pred_region
    _
  $region9: #{blur.1} parent=0 // pred_fallthru
    _
  %v11 = vld [vmem:[%s0] sm:$0xff]
  %v12 = vld [vmem:[%s0 + $0x8] sm:$0xff]
  %v13 = vld [vmem:[%s1] sm:$0x1f]
  %v14 = vld [vmem:[%s1 + $0x8] sm:$0x1f]
  %15 = vrot.lane.b32.xlu0 %v11, 1
  %v16 = vpop.permute.xlu0 %15
  %17 = vrot.lane.b32.xlu0 %v12, 1
  %v18 = vpop.permute.xlu0 %17
  %v19 = vlaneseq
  %v20 = vand.u32 %v19, 127
  %vm21 = vcmp.lt.s32.totalorder %v20, 1
  %v22 = vsel %vm21, %v16, %v18
  %v23 = vsel %vm21, %v18, %v16
  %24 = vrot.lane.b32.xlu0 %v11, 127
  %v25 = vpop.permute.xlu0 %24
  %26 = vrot.lane.b32.xlu0 %v12, 127
  %v27 = vpop.permute.xlu0 %26
  %vm28 = vcmp.lt.s32.totalorder %v20, 127
  %v29 = vsel %vm28, %v25, %v27
  %v30 = vsel %vm28, %v27, %v25
  %v31 = vmul.f32 %v11, 0.9192242
  %v32 = vmul.f32 %v12, 0.9192242
  %v33 = vperm.slane %v13, 0
  %v34 = vperm.slane %v14, 0
  %v35 = vmul.f32 %v23, %v33
  %v36 = vmul.f32 %v22, %v34
  %v37 = vadd.f32 %v31, %v35
  %v38 = vadd.f32 %v32, %v36
  %v39 = vperm.slane %v13, 1
  %v40 = vperm.slane %v14, 1
  %v41 = vmul.f32 %v29, %v39
  %v42 = vmul.f32 %v30, %v40
  %v43 = vadd.f32 %v37, %v41
  %v44 = vadd.f32 %v38, %v42
  %45 = vrot.lane.b32.xlu0 %v43, 16
  %v46 = vpop.permute.xlu0 %45
  %47 = vrot.lane.b32.xlu0 %v44, 16
  %v48 = vpop.permute.xlu0 %47
  %vm49 = vcmp.lt.s32.totalorder %v20, 16
  %v50 = vsel %vm49, %v46, %v48
  %v51 = vsel %vm49, %v48, %v46
  %52 = vrot.lane.b32.xlu0 %v43, 112
  %v53 = vpop.permute.xlu0 %52
  %54 = vrot.lane.b32.xlu0 %v44, 112
  %v55 = vpop.permute.xlu0 %54
  %vm56 = vcmp.lt.s32.totalorder %v20, 112
  %v57 = vsel %vm56, %v53, %v55
  %v58 = vsel %vm56, %v55, %v53
  %v59 = vmul.f32 %v43, 0.9192242
  %v60 = vmul.f32 %v44, 0.9192242
  %v61 = vperm.slane %v13, 2
  %v62 = vperm.slane %v14, 2
  %v63 = vmul.f32 %v51, %v61
  %v64 = vmul.f32 %v50, %v62
  %v65 = vadd.f32 %v59, %v63
  %v66 = vadd.f32 %v60, %v64
  %v67 = vperm.slane %v13, 3
  %v68 = vperm.slane %v14, 3
  %v69 = vmul.f32 %v57, %v67
  %v70 = vmul.f32 %v58, %v68
  %v71 = vadd.f32 %v65, %v69
  %v72 = vadd.f32 %v66, %v70
  %v73 = vperm.slane %v13, 4
  %v74 = vperm.slane %v14, 4
  %v75 = vmul.f32 %v71, %v73
  %v76 = vmul.f32 %v72, %v74
  %77 = vst [vmem:[%s2] sm:$0xff] %v75
  %78 = vst [vmem:[%s2 + $0x8] sm:$0xff] %v76
  // Predicated region
  $region10: #{blur.1} parent=0 // pred_check
    _
  $region11: #{blur.1} parent=0 // pred_check_branch
    %80 = sbr.rel (0) target = $region13
  $region12: #{blur.1} parent=0 // pred_region
    _
  $region13: #{blur.1} parent=0 // pred_fallthru
    _
  // Predicated region
  $region14: #{blur.1} parent=0 // pred_check
    _
  $region15: #{blur.1} parent=0 // pred_check_branch
    %82 = sbr.rel (0) target = $region17
  $region16: #{blur.1} parent=0 // pred_region
    _
  $region17: #{blur.1} parent=0 // pred_fallthru
    _

</llo_original>
